<compile_context>
chip_gen: v7x
topology: tpu7x:2x2x1
jax: 0.10.0
libtpu: 0.0.40
codegen_flags: <defaults>
</compile_context>

<pallas_src>
import jax
import jax.numpy as jnp
from jax.experimental import pallas as pl
from jax.experimental.pallas import tpu as pltpu

GAMMA = 1.5          # module default
SUBLANE = 8
LANE = 128
TILE_M_MAX = 8192    # lanes per grid step -> 8*8192 = 65536 samples / step


def _round_up(x, m):
    return (x + m - 1) // m * m


def _make_kernel(gamma):
    def focal_loss_kernel(x_ref, t_ref, o_ref):
        # x_ref: (C, 8, TILE_M) logits; t_ref: (8, TILE_M) int32; o_ref: (8, TILE_M) f32
        x = x_ref[...].astype(jnp.float32)          # upcast in VMEM (bf16 wire OK)
        t = t_ref[...]
        c = x.shape[0]

        # numerically-stable log-softmax pieces; class axis is the leading dim,
        # so these reduces are plain elementwise VPU ops on dense (8, TILE_M) vregs.
        m = jnp.max(x, axis=0)                      # (8, TILE_M)
        xm = x - m                                  # (C, 8, TILE_M)
        e = jnp.exp(xm)                             # EUP, fully dense vregs
        s = jnp.sum(e, axis=0)                      # (8, TILE_M)

        # one-hot gather of (x_t - m): unrolled over the tiny class axis,
        # pure VPU selects, no float mask multiply, reuses xm.
        xt_m = jnp.zeros_like(m)
        for k in range(c):
            xt_m = jnp.where(t == k, xm[k], xt_m)   # (8, TILE_M)

        log_p = xt_m - jnp.log(s)                   # (8, TILE_M)
        p_t = jnp.exp(log_p)
        om = 1.0 - p_t

        if gamma == 1.5:
            focal = om * jnp.sqrt(om)               # (1-p)^1.5, EUP sqrt
        elif gamma == 2.0:
            focal = om * om
        elif gamma == 1.0:
            focal = om
        else:
            focal = jnp.exp(jnp.float32(gamma) * jnp.log(om))

        o_ref[...] = -focal * log_p
    return focal_loss_kernel


def focal_loss(inputs, targets, gamma=GAMMA):
    """inputs: (N, C) logits (f32 or bf16); targets: (N,) int class ids in [0, C).
    Returns (N, 1) float32 per-sample focal loss (matches the PyTorch module)."""
    n, c = inputs.shape

    # ---- tiling: samples -> (8 sublanes, m_total lanes), 1-D grid over lanes ----
    m_raw = pl.cdiv(n, SUBLANE)
    grid_len = max(1, pl.cdiv(m_raw, TILE_M_MAX))
    if m_raw > LANE:
        grid_len = max(grid_len, 2)     # keep >= 2 steps so both v7x TCs get work
    tile_m = _round_up(pl.cdiv(m_raw, grid_len), LANE)
    m_total = grid_len * tile_m
    n_pad = SUBLANE * m_total

    # ---- single fused relayout pass (dtype preserved on the wire) ----
    x_cn = inputs.T if n_pad == n else jnp.pad(inputs.T, ((0, 0), (0, n_pad - n)))
    x3 = x_cn.reshape(c, SUBLANE, m_total)          # free row-major split

    t_p = targets.astype(jnp.int32)
    if n_pad != n:
        t_p = jnp.pad(t_p, (0, n_pad - n))
    t2 = t_p.reshape(SUBLANE, m_total)              # free reshape

    out = pl.pallas_call(
        _make_kernel(float(gamma)),
        out_shape=jax.ShapeDtypeStruct((SUBLANE, m_total), jnp.float32),
        grid_spec=pltpu.PrefetchScalarGridSpec(
            num_scalar_prefetch=0,
            grid=(grid_len,),
            in_specs=[
                pl.BlockSpec((c, SUBLANE, tile_m), lambda i: (0, 0, i)),
                pl.BlockSpec((SUBLANE, tile_m), lambda i: (0, i)),
            ],
            out_specs=pl.BlockSpec((SUBLANE, tile_m), lambda i: (0, i)),
        ),
        compiler_params=pltpu.CompilerParams(
            dimension_semantics=("parallel",),       # shard tiles across v7x's 2 TCs
            vmem_limit_bytes=32 * 1024 * 1024,       # safe on v7x (64 MiB physical)
        ),
    )(x3, t2)

    # (8, m_total) -> (n_pad,) is a free reshape; sample j lives at flat index j.
    return out.reshape(n_pad)[:n].reshape(n, 1)


def focal_loss_ref(inputs, targets, gamma=GAMMA):
    p = jax.nn.softmax(inputs.astype(jnp.float32), axis=1)
    probs = jnp.take_along_axis(p, targets.reshape(-1, 1), axis=1)
    return -jnp.power(1.0 - probs, gamma) * jnp.log(probs)


if __name__ == "__main__":
    key = jax.random.PRNGKey(0)
    k1, k2, k3, k4 = jax.random.split(key, 4)
    C = 10  # ANIMAL-10N has 10 classes

    # small canonical shape
    N = 8
    logits = jax.random.normal(k1, (N, C), dtype=jnp.float32)
    targets = jax.random.randint(k2, (N,), 0, C, dtype=jnp.int32)
    out = focal_loss(logits, targets)
    jax.block_until_ready(out)
    ref = focal_loss_ref(logits, targets)
    assert out.shape == (N, 1)
    assert jnp.allclose(out, ref, atol=1e-5, rtol=1e-5), (out, ref)

    # multi-block + padded-tail path (grid > 1, N not a multiple of the tile)
    N2 = 2072
    logits2 = jax.random.normal(k3, (N2, C), dtype=jnp.float32)
    targets2 = jax.random.randint(k4, (N2,), 0, C, dtype=jnp.int32)
    out2 = focal_loss(logits2, targets2)
    jax.block_until_ready(out2)
    ref2 = focal_loss_ref(logits2, targets2)
    assert out2.shape == (N2, 1)
    assert jnp.allclose(out2, ref2, atol=1e-5, rtol=1e-5)

    print("KERNEL_OK")
</pallas_src>

<mosaic_0001>
module attributes {stable_mosaic.version = 11 : i64} {
  func.func @focal_loss_kernel(%arg0: i32, %arg1: memref<10x8x128xf32, #tpu.memory_space<vmem>>, %arg2: memref<8x128xi32, #tpu.memory_space<vmem>>, %arg3: memref<8x128xf32, #tpu.memory_space<vmem>>) attributes {dimension_semantics = [#tpu.dimension_semantics<parallel>], iteration_bounds = array<i64: 1>, scalar_prefetch = 0 : i64, scratch_operands = 0 : i64, tpu.core_type = #tpu.core_type<tc>, window_params = [{transform_indices = @transform_0, window_bounds = array<i64: 10, 8, 128>}, {transform_indices = @transform_1, window_bounds = array<i64: 8, 128>}, {transform_indices = @transform_2, window_bounds = array<i64: 8, 128>}]} {
    %c0 = arith.constant 0 : index
    %c0_0 = arith.constant 0 : index
    %c0_1 = arith.constant 0 : index
    %0 = vector.load %arg1[%c0, %c0_0, %c0_1] : memref<10x8x128xf32, #tpu.memory_space<vmem>>, vector<10x8x128xf32>
    %c0_2 = arith.constant 0 : index
    %c0_3 = arith.constant 0 : index
    %1 = vector.load %arg2[%c0_2, %c0_3] : memref<8x128xi32, #tpu.memory_space<vmem>>, vector<8x128xi32>
    %cst = arith.constant dense<0xFF800000> : vector<8x128xf32>
    %2 = vector.multi_reduction <maximumf>, %0, %cst [0] : vector<10x8x128xf32> to vector<8x128xf32>
    %3 = vector.shape_cast %2 : vector<8x128xf32> to vector<1x8x128xf32>
    %4 = vector.broadcast %3 : vector<1x8x128xf32> to vector<10x8x128xf32>
    %5 = arith.subf %0, %4 : vector<10x8x128xf32>
    %6 = math.exp %5 : vector<10x8x128xf32>
    %cst_4 = arith.constant dense<0.000000e+00> : vector<8x128xf32>
    %7 = vector.multi_reduction <add>, %6, %cst_4 [0] : vector<10x8x128xf32> to vector<8x128xf32>
    %cst_5 = arith.constant 0.000000e+00 : f32
    %8 = vector.broadcast %cst_5 : f32 to vector<8x128xf32>
    %c0_i32 = arith.constant 0 : i32
    %9 = vector.broadcast %c0_i32 : i32 to vector<8x128xi32>
    %10 = arith.cmpi eq, %1, %9 : vector<8x128xi32>
    %11 = vector.extract_strided_slice %5 {offsets = [0, 0, 0], sizes = [1, 8, 128], strides = [1, 1, 1]} : vector<10x8x128xf32> to vector<1x8x128xf32>
    %12 = vector.shape_cast %11 : vector<1x8x128xf32> to vector<8x128xf32>
    %13 = arith.select %10, %12, %8 : vector<8x128xi1>, vector<8x128xf32>
    %c1_i32 = arith.constant 1 : i32
    %14 = vector.broadcast %c1_i32 : i32 to vector<8x128xi32>
    %15 = arith.cmpi eq, %1, %14 : vector<8x128xi32>
    %16 = vector.extract_strided_slice %5 {offsets = [1, 0, 0], sizes = [1, 8, 128], strides = [1, 1, 1]} : vector<10x8x128xf32> to vector<1x8x128xf32>
    %17 = vector.shape_cast %16 : vector<1x8x128xf32> to vector<8x128xf32>
    %18 = arith.select %15, %17, %13 : vector<8x128xi1>, vector<8x128xf32>
    %c2_i32 = arith.constant 2 : i32
    %19 = vector.broadcast %c2_i32 : i32 to vector<8x128xi32>
    %20 = arith.cmpi eq, %1, %19 : vector<8x128xi32>
    %21 = vector.extract_strided_slice %5 {offsets = [2, 0, 0], sizes = [1, 8, 128], strides = [1, 1, 1]} : vector<10x8x128xf32> to vector<1x8x128xf32>
    %22 = vector.shape_cast %21 : vector<1x8x128xf32> to vector<8x128xf32>
    %23 = arith.select %20, %22, %18 : vector<8x128xi1>, vector<8x128xf32>
    %c3_i32 = arith.constant 3 : i32
    %24 = vector.broadcast %c3_i32 : i32 to vector<8x128xi32>
    %25 = arith.cmpi eq, %1, %24 : vector<8x128xi32>
    %26 = vector.extract_strided_slice %5 {offsets = [3, 0, 0], sizes = [1, 8, 128], strides = [1, 1, 1]} : vector<10x8x128xf32> to vector<1x8x128xf32>
    %27 = vector.shape_cast %26 : vector<1x8x128xf32> to vector<8x128xf32>
    %28 = arith.select %25, %27, %23 : vector<8x128xi1>, vector<8x128xf32>
    %c4_i32 = arith.constant 4 : i32
    %29 = vector.broadcast %c4_i32 : i32 to vector<8x128xi32>
    %30 = arith.cmpi eq, %1, %29 : vector<8x128xi32>
    %31 = vector.extract_strided_slice %5 {offsets = [4, 0, 0], sizes = [1, 8, 128], strides = [1, 1, 1]} : vector<10x8x128xf32> to vector<1x8x128xf32>
    %32 = vector.shape_cast %31 : vector<1x8x128xf32> to vector<8x128xf32>
    %33 = arith.select %30, %32, %28 : vector<8x128xi1>, vector<8x128xf32>
    %c5_i32 = arith.constant 5 : i32
    %34 = vector.broadcast %c5_i32 : i32 to vector<8x128xi32>
    %35 = arith.cmpi eq, %1, %34 : vector<8x128xi32>
    %36 = vector.extract_strided_slice %5 {offsets = [5, 0, 0], sizes = [1, 8, 128], strides = [1, 1, 1]} : vector<10x8x128xf32> to vector<1x8x128xf32>
    %37 = vector.shape_cast %36 : vector<1x8x128xf32> to vector<8x128xf32>
    %38 = arith.select %35, %37, %33 : vector<8x128xi1>, vector<8x128xf32>
    %c6_i32 = arith.constant 6 : i32
    %39 = vector.broadcast %c6_i32 : i32 to vector<8x128xi32>
    %40 = arith.cmpi eq, %1, %39 : vector<8x128xi32>
    %41 = vector.extract_strided_slice %5 {offsets = [6, 0, 0], sizes = [1, 8, 128], strides = [1, 1, 1]} : vector<10x8x128xf32> to vector<1x8x128xf32>
    %42 = vector.shape_cast %41 : vector<1x8x128xf32> to vector<8x128xf32>
    %43 = arith.select %40, %42, %38 : vector<8x128xi1>, vector<8x128xf32>
    %c7_i32 = arith.constant 7 : i32
    %44 = vector.broadcast %c7_i32 : i32 to vector<8x128xi32>
    %45 = arith.cmpi eq, %1, %44 : vector<8x128xi32>
    %46 = vector.extract_strided_slice %5 {offsets = [7, 0, 0], sizes = [1, 8, 128], strides = [1, 1, 1]} : vector<10x8x128xf32> to vector<1x8x128xf32>
    %47 = vector.shape_cast %46 : vector<1x8x128xf32> to vector<8x128xf32>
    %48 = arith.select %45, %47, %43 : vector<8x128xi1>, vector<8x128xf32>
    %c8_i32 = arith.constant 8 : i32
    %49 = vector.broadcast %c8_i32 : i32 to vector<8x128xi32>
    %50 = arith.cmpi eq, %1, %49 : vector<8x128xi32>
    %51 = vector.extract_strided_slice %5 {offsets = [8, 0, 0], sizes = [1, 8, 128], strides = [1, 1, 1]} : vector<10x8x128xf32> to vector<1x8x128xf32>
    %52 = vector.shape_cast %51 : vector<1x8x128xf32> to vector<8x128xf32>
    %53 = arith.select %50, %52, %48 : vector<8x128xi1>, vector<8x128xf32>
    %c9_i32 = arith.constant 9 : i32
    %54 = vector.broadcast %c9_i32 : i32 to vector<8x128xi32>
    %55 = arith.cmpi eq, %1, %54 : vector<8x128xi32>
    %56 = vector.extract_strided_slice %5 {offsets = [9, 0, 0], sizes = [1, 8, 128], strides = [1, 1, 1]} : vector<10x8x128xf32> to vector<1x8x128xf32>
    %57 = vector.shape_cast %56 : vector<1x8x128xf32> to vector<8x128xf32>
    %58 = arith.select %55, %57, %53 : vector<8x128xi1>, vector<8x128xf32>
    %59 = math.log %7 : vector<8x128xf32>
    %60 = arith.subf %58, %59 : vector<8x128xf32>
    %61 = math.exp %60 : vector<8x128xf32>
    %cst_6 = arith.constant 1.000000e+00 : f32
    %62 = vector.broadcast %cst_6 : f32 to vector<8x128xf32>
    %63 = arith.subf %62, %61 : vector<8x128xf32>
    %64 = math.sqrt %63 : vector<8x128xf32>
    %65 = arith.mulf %63, %64 : vector<8x128xf32>
    %cst_7 = arith.constant 0.000000e+00 : f32
    %66 = vector.broadcast %cst_7 : f32 to vector<8x128xf32>
    %67 = arith.subf %66, %65 : vector<8x128xf32>
    %68 = arith.mulf %67, %60 : vector<8x128xf32>
    %c0_8 = arith.constant 0 : index
    %c0_9 = arith.constant 0 : index
    %69 = vector.load %arg3[%c0_8, %c0_9] : memref<8x128xf32, #tpu.memory_space<vmem>>, vector<8x128xf32>
    tpu.vector_store %arg3[%c0_8, %c0_9], %68 {strides = array<i32>} : memref<8x128xf32, #tpu.memory_space<vmem>>, vector<8x128xf32>,
    return
  }
  func.func @transform_0(%arg0: i32) -> (i32, i32, i32) {
    %c0_i32 = arith.constant 0 : i32
    %c0_i32_0 = arith.constant 0 : i32
    %c0_i32_1 = arith.constant 0 : i32
    return %c0_i32, %c0_i32_0, %arg0 : i32, i32, i32
  }
  func.func @transform_1(%arg0: i32) -> (i32, i32) {
    %c0_i32 = arith.constant 0 : i32
    %c0_i32_0 = arith.constant 0 : i32
    return %c0_i32, %arg0 : i32, i32
  }
  func.func @transform_2(%arg0: i32) -> (i32, i32) {
    %c0_i32 = arith.constant 0 : i32
    %c0_i32_0 = arith.constant 0 : i32
    return %c0_i32, %arg0 : i32, i32
  }
}

</mosaic_0001>

<llo_original>
// kernel: tpu_custom_call.1
$region0: #{tpu_custom_call.1}
  #allocation0 [shape = 'u32[]', space=smem, size = 0x4, offset = 0x4, fixed_abs, tag = 'smem constant byte address 0x4 - core index']
  #allocation1 [shape = 'u32[144,128]{1,0:T(1,128)}', space=vmem, size = 0x12000, scoped, tag = 'internal scratch']
  %s0 = inlined_call_operand.hbm [shape: f32[10,8,128], index: 0, kind: input, shape index: {}]
  %s1 = inlined_call_operand.hbm [shape: s32[8,128], index: 1, kind: input, shape index: {}]
  %s2 = inlined_call_operand.hbm [shape: f32[8,128], index: 2, kind: output, shape index: {}]
  %s3 = sld [smem:[#allocation0]]
  $region26: #{tpu_custom_call.1} parent=0
    _
  %s5 = ssub.s32 1, %s3
  %s6 = scalar_select 0, %s5, %s3
  $region1: #{tpu_custom_call.1} parent=0
    #allocation2 [shape = 'u8[40960]{0}', space=vmem, size = 0xa000, scoped, tag = 'input window, operand 0, single buffered']
    #allocation3 [shape = 's32[1]{0}', space=sflag, size = 0x4, scoped, tag = 'scoped memory for tpu_custom_call.1']
    #allocation4 [shape = 's32[1]{0}', space=sflag, size = 0x4, scoped, tag = 'scoped memory for tpu_custom_call.1']
    #allocation5 [shape = 'u8[4096]{0}', space=vmem, size = 0x1000, scoped, tag = 'input window, operand 1, single buffered']
    #allocation6 [shape = 's32[1]{0}', space=sflag, size = 0x4, scoped, tag = 'scoped memory for tpu_custom_call.1']
    #allocation7 [shape = 'u8[4096]{0}', space=vmem, size = 0x1000, scoped, tag = 'output window, operand 0, single buffered']
    %7 = vsyncpa [#allocation3], 0
    %8 = vsyncpa [#allocation6], 0
    %9 = vsyncpa [#allocation4], 0
    // Predicated region
    $region2: #{tpu_custom_call.1} parent=1 // pred_check
      _
    $region3: #{tpu_custom_call.1} parent=1 // pred_check_branch
      %11 = sbr.rel (0) target = $region5
    $region4: #{tpu_custom_call.1} parent=1 // pred_region
      %s13 = ssub.s32 1280, 1280
      %14 = vsyncadd [#allocation3], %s13
      %s15 = sshll.u32 [#allocation2], 4
      %s16 = int_to_ptr.vmem [resolvable:$true] %s15
      %21 = dma.hbm_to_vmem [thread:$0]  %s0, 1280, %s16, [#allocation3], 128, 128, 8
    $region5: #{tpu_custom_call.1} parent=1 // pred_fallthru
      _
    // Predicated region
    $region6: #{tpu_custom_call.1} parent=1 // pred_check
      _
    $region7: #{tpu_custom_call.1} parent=1 // pred_check_branch
      %23 = sbr.rel (0) target = $region9
    $region8: #{tpu_custom_call.1} parent=1 // pred_region
      %s25 = ssub.s32 128, 128
      %26 = vsyncadd [#allocation6], %s25
      %s28 = sshll.u32 [#allocation5], 4
      %s29 = int_to_ptr.vmem [resolvable:$true] %s28
      %31 = dma.hbm_to_vmem [thread:$0]  %s1, 128, %s29, [#allocation6]
    $region9: #{tpu_custom_call.1} parent=1 // pred_fallthru
      _
    // Predicated region
    $region10: #{tpu_custom_call.1} parent=1 // pred_check
      _
    $region11: #{tpu_custom_call.1} parent=1 // pred_check_branch
      %33 = sbr.rel (0) target = $region13
    $region12: #{tpu_custom_call.1} parent=1 // pred_region
      %34 = dma.done [#allocation3], 1280
    $region13: #{tpu_custom_call.1} parent=1 // pred_fallthru
      _
    // Predicated region
    $region14: #{tpu_custom_call.1} parent=1 // pred_check
      _
    $region15: #{tpu_custom_call.1} parent=1 // pred_check_branch
      %36 = sbr.rel (0) target = $region17
    $region16: #{tpu_custom_call.1} parent=1 // pred_region
      %37 = dma.done [#allocation6], 128
    $region17: #{tpu_custom_call.1} parent=1 // pred_fallthru
      _
    %v38 = vld [vmem:[#allocation2] sm:$0xff]
    %v39 = vld [vmem:[#allocation2 + $0x8] sm:$0xff]
    %v40 = vld [vmem:[#allocation2 + $0x10] sm:$0xff]
    %v41 = vld [vmem:[#allocation2 + $0x18] sm:$0xff]
    %v42 = vld [vmem:[#allocation2 + $0x20] sm:$0xff]
    %v43 = vld [vmem:[#allocation2 + $0x28] sm:$0xff]
    %v44 = vld [vmem:[#allocation2 + $0x30] sm:$0xff]
    %v45 = vld [vmem:[#allocation2 + $0x38] sm:$0xff]
    %v46 = vld [vmem:[#allocation2 + $0x40] sm:$0xff]
    %v47 = vld [vmem:[#allocation2 + $0x48] sm:$0xff]
    %v48 = vld [vmem:[#allocation5] sm:$0xff]
    %v49 = vmax.f32 %v38, %v42
    %v50 = vmax.f32 %v39, %v43
    %v51 = vmax.f32 %v40, %v44
    %v52 = vmax.f32 %v41, %v45
    %v53 = vmax.f32 %v49, %v46
    %v54 = vmax.f32 %v50, %v47
    %v55 = vmax.f32 %v53, %v54
    %v56 = vmax.f32 %v51, %v52
    %v57 = vmax.f32 %v55, %v56
    %v58 = vsub.f32 %v38, %v57
    %v59 = vsub.f32 %v39, %v57
    %v60 = vsub.f32 %v40, %v57
    %v61 = vsub.f32 %v41, %v57
    %v62 = vsub.f32 %v42, %v57
    %v63 = vsub.f32 %v43, %v57
    %v64 = vsub.f32 %v44, %v57
    %v65 = vsub.f32 %v45, %v57
    %v66 = vsub.f32 %v46, %v57
    %v67 = vsub.f32 %v47, %v57
    %v68 = vmul.f32 %v58, 1.442695
    %v69 = vpow.pop %v68
    %v70 = vmul.f32 %v59, 1.442695
    %v71 = vpow.pop %v70
    %v72 = vmul.f32 %v60, 1.442695
    %v73 = vpow.pop %v72
    %v74 = vmul.f32 %v61, 1.442695
    %v75 = vpow.pop %v74
    %v76 = vmul.f32 %v62, 1.442695
    %v77 = vpow.pop %v76
    %v78 = vmul.f32 %v63, 1.442695
    %v79 = vpow.pop %v78
    %v80 = vmul.f32 %v64, 1.442695
    %v81 = vpow.pop %v80
    %v82 = vmul.f32 %v65, 1.442695
    %v83 = vpow.pop %v82
    %v84 = vmul.f32 %v66, 1.442695
    %v85 = vpow.pop %v84
    %v86 = vmul.f32 %v67, 1.442695
    %v87 = vpow.pop %v86
    %v88 = vadd.f32 %v69, %v71
    %v89 = vadd.f32 %v88, %v73
    %v90 = vadd.f32 %v89, %v75
    %v91 = vadd.f32 %v90, %v77
    %v92 = vadd.f32 %v91, %v79
    %v93 = vadd.f32 %v92, %v81
    %v94 = vadd.f32 %v93, %v83
    %v95 = vadd.f32 %v94, %v85
    %v96 = vadd.f32 %v95, %v87
    %vm97 = vcmp.eq.s32.totalorder %v48, 0
    %v98 = vsel %vm97, %v58, 0.0
    %vm99 = vcmp.eq.s32.totalorder %v48, 1
    %v100 = vsel %vm99, %v59, %v98
    %vm101 = vcmp.eq.s32.totalorder %v48, 2
    %v102 = vsel %vm101, %v60, %v100
    %vm103 = vcmp.eq.s32.totalorder %v48, 3
    %v104 = vsel %vm103, %v61, %v102
    %vm105 = vcmp.eq.s32.totalorder %v48, 4
    %v106 = vsel %vm105, %v62, %v104
    %vm107 = vcmp.eq.s32.totalorder %v48, 5
    %v108 = vsel %vm107, %v63, %v106
    %vm109 = vcmp.eq.s32.totalorder %v48, 6
    %v110 = vsel %vm109, %v64, %v108
    %vm111 = vcmp.eq.s32.totalorder %v48, 7
    %v112 = vsel %vm111, %v65, %v110
    %vm113 = vcmp.eq.s32.totalorder %v48, 8
    %v114 = vsel %vm113, %v66, %v112
    %vm115 = vcmp.eq.s32.totalorder %v48, 9
    %v116 = vsel %vm115, %v67, %v114
    %v117 = vlog2.pop %v96
    %v118 = vmul.f32 %v117, 0.6931472
    %v119 = vsub.f32 %v116, %v118
    %v120 = vmul.f32 %v119, 1.442695
    %v121 = vpow.pop %v120
    %v122 = vsub.f32 1.0, %v121
    %v123 = vrsqrt.pop %v122
    %v124 = vmul.f32 %v122, %v123
    %vm125 = vcmp.eq.f32.partialorder %v122, inf
    %v126 = vsel %vm125, %v122, %v124
    %vm127 = vcmp.eq.f32.partialorder %v122, 0.0
    %v128 = vand.u32 %v122, 2147483648
    %v129 = vsel %vm127, %v128, %v126
    %v130 = vmul.f32 %v122, %v129
    %v131 = vsub.f32 0.0, %v130
    %v132 = vmul.f32 %v131, %v119
    %133 = vst [vmem:[#allocation7] sm:$0xff] %v132
    // Predicated region
    $region18: #{tpu_custom_call.1} parent=1 // pred_check
      _
    $region19: #{tpu_custom_call.1} parent=1 // pred_check_branch
      %135 = sbr.rel (0) target = $region21
    $region20: #{tpu_custom_call.1} parent=1 // pred_region
      %s137 = ssub.s32 128, 128
      %138 = vsyncadd [#allocation4], %s137
      %s140 = sshll.u32 [#allocation7], 4
      %s141 = int_to_ptr.vmem [resolvable:$true] %s140
      %143 = dma.vmem_to_hbm [thread:$0]  %s141, 128, %s2, [#allocation4]
    $region21: #{tpu_custom_call.1} parent=1 // pred_fallthru
      _
    // Predicated region
    $region22: #{tpu_custom_call.1} parent=1 // pred_check
      _
    $region23: #{tpu_custom_call.1} parent=1 // pred_check_branch
      %145 = sbr.rel (0) target = $region25
    $region24: #{tpu_custom_call.1} parent=1 // pred_region
      %146 = dma.done [#allocation4], 128
    $region25: #{tpu_custom_call.1} parent=1 // pred_fallthru
      _
    %147 = vsyncpa [#allocation3], 1
    %148 = vsyncpa [#allocation6], 1
    %149 = vsyncpa [#allocation4], 1

</llo_original>
